<compile_context>
chip_gen: v5e
topology: v5e:2x2
jax: 0.10.0
libtpu: 0.0.40
codegen_flags: <defaults>
</compile_context>

<pallas_src>
import functools

import jax
import jax.numpy as jnp
from jax.experimental import pallas as pl
from jax.experimental.pallas import tpu as pltpu


def _disc_kernel(x_ref, w1_ref, b1_ref, w2_ref, b2_ref, o_ref, acc_ref, *,
                 d_total, tk):
    """One (batch-tile i, feature-tile k) grid step.

    acc_ref (H, TB) f32 accumulates h^T = W1 @ x^T across feature tiles; the
    bias / ReLU / fc2 / sigmoid epilogue runs once on the last K step.
    """
    k = pl.program_id(1)
    nk = pl.num_programs(1)

    @pl.when(k == 0)
    def _():
        acc_ref[...] = jnp.zeros_like(acc_ref)

    x = x_ref[...]
    w1 = w1_ref[...]
    if d_total % tk != 0:
        # Ragged last feature tile: out-of-range columns of an edge block are
        # undefined (could be NaN/Inf), so zero them in BOTH operands before
        # they hit the accumulating matmul.
        d_rem = d_total - k * tk
        x = jnp.where(
            jax.lax.broadcasted_iota(jnp.int32, x.shape, 1) < d_rem, x, 0)
        w1 = jnp.where(
            jax.lax.broadcasted_iota(jnp.int32, w1.shape, 1) < d_rem, w1, 0)

    # h^T = W1 @ x^T : contract the feature dim of both operands (bf16 on the
    # MXU, f32 accumulation).  Batch lands on lanes.
    acc_ref[...] += jax.lax.dot_general(
        w1.astype(jnp.bfloat16), x.astype(jnp.bfloat16),
        dimension_numbers=(((1,), (1,)), ((), ())),
        preferred_element_type=jnp.float32)                     # (H, TB)

    @pl.when(k == nk - 1)
    def _():
        h = jnp.maximum(acc_ref[...] + b1_ref[...], 0.0)        # (H,TB)+(H,1)
        y = jnp.sum(h * w2_ref[...], axis=0, keepdims=True)     # (1, TB)
        o_ref[...] = jax.nn.sigmoid(y + b2_ref[...])            # lane-dense row


def _pick_tiles(B, D, itemsize, target_bytes=2 << 20):
    """Bytes-driven tiling: aim for ~target_bytes of x per grid step.

    Keeps the per-step DMA chunk in the 1-4 MiB sweet spot on all generations
    (amortizes ~0.35us/step overhead) while double-buffered tiles stay a few
    MiB — far under v5e's 16 MiB default scoped VMEM and v7x's 64 MiB physical.
    """
    # Feature (K) tile: keep the full feature dim unless even a 128-row batch
    # tile of it would exceed the budget; then split D into 128-lane multiples
    # and accumulate across the K grid axis.
    if D <= 128 or D * 128 * itemsize <= target_bytes:
        tk = D
    else:
        tk = max(128, ((target_bytes // (128 * itemsize)) // 128) * 128)
        tk = min(tk, (D // 128) * 128)
    # Batch tile: fill the remaining budget, multiple of 128 (lane dim of the
    # lane-dense output row).
    tb = max(128, ((target_bytes // (tk * itemsize)) // 128) * 128)
    if tb >= B:
        tb = B                                   # single full-batch tile
    # v7x megacore: keep >= 2 steps on the parallel batch axis when possible so
    # both TensorCores (and both shares of HBM bandwidth) are used.
    if B > 128 and pl.cdiv(B, tb) < 2:
        half = ((pl.cdiv(B, 2) + 127) // 128) * 128
        tb = half if half < B else B
    return tb, tk


def discriminator_forward(x, w1, b1, w2, b2, *, tb=None, tk=None):
    """Fused Discriminator forward.

    x : (B, D) activations, passed in their native dtype (cast to bf16 in-kernel)
    w1: (4, D) fc1 weight  (PyTorch (out, in) layout)
    b1: (4,)   fc1 bias
    w2: (4,)   fc2 weight  (PyTorch (1, 4) flattened)
    b2: (1,)   fc2 bias
    returns (B, 1) float32 sigmoid probabilities.
    """
    B, D = x.shape
    H = w1.shape[0]
    tb_auto, tk_auto = _pick_tiles(B, D, x.dtype.itemsize)
    tb = tb_auto if tb is None else min(tb, B)
    tk = tk_auto if tk is None else min(tk, D)

    nb = pl.cdiv(B, tb)
    nk = pl.cdiv(D, tk)

    b1_col = b1.astype(jnp.float32).reshape(H, 1)
    w2_col = w2.astype(jnp.float32).reshape(H, 1)
    b2_col = b2.astype(jnp.float32).reshape(1, 1)

    kernel = functools.partial(_disc_kernel, d_total=D, tk=tk)

    out_row = pl.pallas_call(
        kernel,
        out_shape=jax.ShapeDtypeStruct((1, B), jnp.float32),
        grid=(nb, nk),
        in_specs=[
            pl.BlockSpec((tb, tk), lambda i, k: (i, k)),   # x: streamed, native dtype
            pl.BlockSpec((H, tk), lambda i, k: (0, k)),    # w1: tiny, per-K column block
            pl.BlockSpec((H, 1), lambda i, k: (0, 0)),     # b1 column, resident
            pl.BlockSpec((H, 1), lambda i, k: (0, 0)),     # w2 column, resident
            pl.BlockSpec((1, 1), lambda i, k: (0, 0)),     # b2, resident
        ],
        out_specs=pl.BlockSpec((1, tb), lambda i, k: (0, i)),  # lane-dense row
        scratch_shapes=[pltpu.VMEM((H, tb), jnp.float32)],     # h^T accumulator
        compiler_params=pltpu.CompilerParams(
            dimension_semantics=("parallel", "arbitrary"),
            vmem_limit_bytes=32 << 20),
    )(x, w1, b1_col, w2_col, b2_col)

    return out_row.reshape(B, 1)


def init_params(key, dim_in):
    """nn.Linear-style U(-1/sqrt(fan_in), 1/sqrt(fan_in)) init, PyTorch layouts."""
    k1, k2, k3, k4 = jax.random.split(key, 4)
    lim1 = 1.0 / jnp.sqrt(jnp.float32(dim_in))
    lim2 = 1.0 / jnp.sqrt(jnp.float32(4))
    w1 = jax.random.uniform(k1, (4, dim_in), jnp.float32, -lim1, lim1)
    b1 = jax.random.uniform(k2, (4,), jnp.float32, -lim1, lim1)
    w2 = jax.random.uniform(k3, (4,), jnp.float32, -lim2, lim2)
    b2 = jax.random.uniform(k4, (1,), jnp.float32, -lim2, lim2)
    return w1, b1, w2, b2


def reference_forward(x, w1, b1, w2, b2):
    # Mirror the kernel's numerics: bf16 matmul inputs, f32 everything else.
    xf = x.astype(jnp.bfloat16).astype(jnp.float32)
    w1f = w1.astype(jnp.bfloat16).astype(jnp.float32)
    h = jnp.maximum(xf @ w1f.T + b1[None, :], 0.0)
    y = h @ w2[:, None] + b2[None, :]
    return jax.nn.sigmoid(y)


if __name__ == "__main__":
    key = jax.random.PRNGKey(0)
    kx, kp, kx2, kp2 = jax.random.split(key, 4)

    # Config 1: B not a multiple of the batch tile -> exercises the ragged
    # batch edge block and the 2-step parallel batch axis (auto tb=128, tk=D).
    B, DIM_IN = 200, 16
    x = jax.random.normal(kx, (B, DIM_IN), dtype=jnp.float32)
    w1, b1, w2, b2 = init_params(kp, DIM_IN)

    out = discriminator_forward(x, w1, b1, w2, b2)
    out = jax.block_until_ready(out)
    ref = reference_forward(x, w1, b1, w2, b2)
    assert out.shape == (B, 1)
    assert jnp.allclose(out, ref, atol=1e-4, rtol=1e-4), "mismatch vs JAX reference"

    # Config 2: feature dim split across the K grid axis with a ragged last K
    # tile (D=320, tk=128) -> exercises the accumulator + feature-mask path.
    B2, D2 = 200, 320
    x2 = jax.random.normal(kx2, (B2, D2), dtype=jnp.float32)
    w1b, b1b, w2b, b2b = init_params(kp2, D2)
    out2 = jax.block_until_ready(
        discriminator_forward(x2, w1b, b1b, w2b, b2b, tb=128, tk=128))
    ref2 = reference_forward(x2, w1b, b1b, w2b, b2b)
    assert out2.shape == (B2, 1)
    assert jnp.allclose(out2, ref2, atol=1e-4, rtol=1e-4), "mismatch (K-split path)"

    print("KERNEL_OK")
</pallas_src>

<mosaic_0001>
module attributes {stable_mosaic.version = 11 : i64} {
  func.func @_disc_kernel(%arg0: i32, %arg1: i32, %arg2: memref<128x16xf32, #tpu.memory_space<vmem>>, %arg3: memref<4x16xf32, #tpu.memory_space<vmem>>, %arg4: memref<4x1xf32, #tpu.memory_space<vmem>>, %arg5: memref<4x1xf32, #tpu.memory_space<vmem>>, %arg6: memref<1x1xf32, #tpu.memory_space<vmem>>, %arg7: memref<1x128xf32, #tpu.memory_space<vmem>>, %arg8: memref<4x128xf32, #tpu.memory_space<vmem>>) attributes {dimension_semantics = [#tpu.dimension_semantics<parallel>, #tpu.dimension_semantics<arbitrary>], iteration_bounds = array<i64: 2, 1>, scalar_prefetch = 0 : i64, scratch_operands = 1 : i64, tpu.core_type = #tpu.core_type<tc>, window_params = [{transform_indices = @transform_0, window_bounds = array<i64: 128, 16>}, {transform_indices = @transform_1, window_bounds = array<i64: 4, 16>}, {pipeline_mode = #tpu.pipeline_mode<synchronous>, transform_indices = @transform_2, window_bounds = array<i64: 4, 1>}, {pipeline_mode = #tpu.pipeline_mode<synchronous>, transform_indices = @transform_3, window_bounds = array<i64: 4, 1>}, {pipeline_mode = #tpu.pipeline_mode<synchronous>, transform_indices = @transform_4, window_bounds = array<i64: 1, 1>}, {transform_indices = @transform_5, window_bounds = array<i64: 1, 128>}]} {
    %c0_i32 = arith.constant 0 : i32
    %0 = arith.cmpi eq, %arg1, %c0_i32 : i32
    %1 = arith.extui %0 : i1 to i32
    %c0_i32_0 = arith.constant 0 : i32
    %2 = arith.cmpi ne, %1, %c0_i32_0 : i32
    scf.if %2 {
      %cst_10 = arith.constant 0.000000e+00 : f32
      %14 = vector.broadcast %cst_10 : f32 to vector<4x128xf32>
      %c0_11 = arith.constant 0 : index
      %c0_12 = arith.constant 0 : index
      %15 = vector.load %arg8[%c0_11, %c0_12] : memref<4x128xf32, #tpu.memory_space<vmem>>, vector<4x128xf32>
      tpu.vector_store %arg8[%c0_11, %c0_12], %14 {strides = array<i32>} : memref<4x128xf32, #tpu.memory_space<vmem>>, vector<4x128xf32>,
    } else {
    }
    %c0 = arith.constant 0 : index
    %c0_1 = arith.constant 0 : index
    %3 = vector.load %arg2[%c0, %c0_1] : memref<128x16xf32, #tpu.memory_space<vmem>>, vector<128x16xf32>
    %c0_2 = arith.constant 0 : index
    %c0_3 = arith.constant 0 : index
    %4 = vector.load %arg3[%c0_2, %c0_3] : memref<4x16xf32, #tpu.memory_space<vmem>>, vector<4x16xf32>
    %c0_4 = arith.constant 0 : index
    %c0_5 = arith.constant 0 : index
    %5 = vector.load %arg8[%c0_4, %c0_5] : memref<4x128xf32, #tpu.memory_space<vmem>>, vector<4x128xf32>
    %6 = arith.truncf %4 : vector<4x16xf32> to vector<4x16xbf16>
    %7 = arith.truncf %3 : vector<128x16xf32> to vector<128x16xbf16>
    %cst = arith.constant dense<0.000000e+00> : vector<4x128xf32>
    %8 = tpu.matmul %6, %7, %cst {dimension_numbers = #tpu.dot_dimension_numbers<[1], [1], [0], [0], [0, 0, 1, 0], [], []>} : vector<4x16xbf16>, vector<128x16xbf16>, vector<4x128xf32> -> vector<4x128xf32>
    %9 = arith.addf %5, %8 : vector<4x128xf32>
    %c0_6 = arith.constant 0 : index
    %c0_7 = arith.constant 0 : index
    %10 = vector.load %arg8[%c0_6, %c0_7] : memref<4x128xf32, #tpu.memory_space<vmem>>, vector<4x128xf32>
    tpu.vector_store %arg8[%c0_6, %c0_7], %9 {strides = array<i32>} : memref<4x128xf32, #tpu.memory_space<vmem>>, vector<4x128xf32>,
    %c0_i32_8 = arith.constant 0 : i32
    %11 = arith.cmpi eq, %arg1, %c0_i32_8 : i32
    %12 = arith.extui %11 : i1 to i32
    %c0_i32_9 = arith.constant 0 : i32
    %13 = arith.cmpi ne, %12, %c0_i32_9 : i32
    scf.if %13 {
      %c0_10 = arith.constant 0 : index
      %c0_11 = arith.constant 0 : index
      %14 = vector.load %arg8[%c0_10, %c0_11] : memref<4x128xf32, #tpu.memory_space<vmem>>, vector<4x128xf32>
      %c0_12 = arith.constant 0 : index
      %c0_13 = arith.constant 0 : index
      %15 = vector.load %arg4[%c0_12, %c0_13] : memref<4x1xf32, #tpu.memory_space<vmem>>, vector<4x1xf32>
      %16 = vector.broadcast %15 : vector<4x1xf32> to vector<4x128xf32>
      %17 = arith.addf %14, %16 : vector<4x128xf32>
      %cst_14 = arith.constant 0.000000e+00 : f32
      %18 = vector.broadcast %cst_14 : f32 to vector<4x128xf32>
      %19 = arith.maximumf %17, %18 : vector<4x128xf32>
      %c0_15 = arith.constant 0 : index
      %c0_16 = arith.constant 0 : index
      %20 = vector.load %arg5[%c0_15, %c0_16] : memref<4x1xf32, #tpu.memory_space<vmem>>, vector<4x1xf32>
      %21 = vector.broadcast %20 : vector<4x1xf32> to vector<4x128xf32>
      %22 = arith.mulf %19, %21 : vector<4x128xf32>
      %cst_17 = arith.constant dense<0.000000e+00> : vector<128xf32>
      %23 = vector.multi_reduction <add>, %22, %cst_17 [0] : vector<4x128xf32> to vector<128xf32>
      %24 = vector.shape_cast %23 : vector<128xf32> to vector<1x128xf32>
      %c0_18 = arith.constant 0 : index
      %c0_19 = arith.constant 0 : index
      %25 = vector.load %arg6[%c0_18, %c0_19] : memref<1x1xf32, #tpu.memory_space<vmem>>, vector<1x1xf32>
      %26 = vector.broadcast %25 : vector<1x1xf32> to vector<1x128xf32>
      %27 = arith.addf %24, %26 : vector<1x128xf32>
      %28 = arith.negf %27 : vector<1x128xf32>
      %29 = math.exp %28 : vector<1x128xf32>
      %cst_20 = arith.constant 1.000000e+00 : f32
      %30 = vector.broadcast %cst_20 : f32 to vector<1x128xf32>
      %31 = arith.addf %30, %29 : vector<1x128xf32>
      %32 = arith.divf %30, %31 : vector<1x128xf32>
      %c0_21 = arith.constant 0 : index
      %c0_22 = arith.constant 0 : index
      %33 = vector.load %arg7[%c0_21, %c0_22] : memref<1x128xf32, #tpu.memory_space<vmem>>, vector<1x128xf32>
      tpu.vector_store %arg7[%c0_21, %c0_22], %32 {strides = array<i32>} : memref<1x128xf32, #tpu.memory_space<vmem>>, vector<1x128xf32>,
    } else {
    }
    return
  }
  func.func @transform_0(%arg0: i32, %arg1: i32) -> (i32, i32) {
    %c0_i32 = arith.constant 0 : i32
    return %arg0, %arg1 : i32, i32
  }
  func.func @transform_1(%arg0: i32, %arg1: i32) -> (i32, i32) {
    %c0_i32 = arith.constant 0 : i32
    %c0_i32_0 = arith.constant 0 : i32
    return %c0_i32, %arg1 : i32, i32
  }
  func.func @transform_2(%arg0: i32, %arg1: i32) -> (i32, i32) {
    %c0_i32 = arith.constant 0 : i32
    %c0_i32_0 = arith.constant 0 : i32
    %c0_i32_1 = arith.constant 0 : i32
    return %c0_i32, %c0_i32_0 : i32, i32
  }
  func.func @transform_3(%arg0: i32, %arg1: i32) -> (i32, i32) {
    %c0_i32 = arith.constant 0 : i32
    %c0_i32_0 = arith.constant 0 : i32
    %c0_i32_1 = arith.constant 0 : i32
    return %c0_i32, %c0_i32_0 : i32, i32
  }
  func.func @transform_4(%arg0: i32, %arg1: i32) -> (i32, i32) {
    %c0_i32 = arith.constant 0 : i32
    %c0_i32_0 = arith.constant 0 : i32
    %c0_i32_1 = arith.constant 0 : i32
    return %c0_i32, %c0_i32_0 : i32, i32
  }
  func.func @transform_5(%arg0: i32, %arg1: i32) -> (i32, i32) {
    %c0_i32 = arith.constant 0 : i32
    %c0_i32_0 = arith.constant 0 : i32
    return %c0_i32, %arg0 : i32, i32
  }
}

</mosaic_0001>

<llo_original>
// kernel: tpu_custom_call.1
$region0: #{tpu_custom_call.1}
  #allocation0 [shape = 'u32[]', space=smem, size = 0x4, offset = 0x4, fixed_abs, tag = 'smem constant byte address 0x4 - core index']
  #allocation1 [shape = 'u32[72,128]{1,0:T(1,128)}', space=vmem, size = 0x9000, scoped, tag = 'internal scratch']
  #allocation2 [shape = 'f32[4,128]{1,0:T(4,128)}', space=vmem, size = 0x800, scoped, tag = 'scratch operand']
  #allocation3 [shape = 'f32[1,1]{1,0:T(1,128)S(1)}', space=vmem, size = 0x200, scoped, tag = 'scoped memory for tpu_custom_call.1']
  %s0 = inlined_call_operand.vmem [shape: f32[200,16], index: 0, kind: input, shape index: {}]
  %s1 = inlined_call_operand.vmem [shape: f32[4,16], index: 1, kind: input, shape index: {}]
  %s2 = inlined_call_operand.vmem [shape: f32[4,1], index: 2, kind: input, shape index: {}]
  %s3 = inlined_call_operand.vmem [shape: f32[4,1], index: 3, kind: input, shape index: {}]
  %s4 = inlined_call_operand.<no memory space> [shape: f32[1,1], index: 4, kind: input, shape index: {}]
  %s5 = inlined_call_operand.hbm [shape: f32[1,200], index: 5, kind: output, shape index: {}]
  %s6 = sld [smem:[#allocation0]]
  $region61: #{tpu_custom_call.1} parent=0
    _
  %s8 = ssub.s32 1, %s6
  %s9 = scalar_select 0, %s8, %s6
  %v10 = vstv %s4
  %11 = vst [vmem:[#allocation3] sm:$0x1] %v10
  $region1: #{tpu_custom_call.1} parent=0
    #allocation4 [shape = 'u8[1024]{0}', space=vmem, size = 0x400, scoped, tag = 'output window, operand 0']
    #allocation5 [shape = 's32[2]{0}', space=sflag, size = 0x8, scoped, tag = 'scoped memory for tpu_custom_call.1']
    %12 = vsyncpa [#allocation5], 0
    %s13 = scalar_lea.sflag [#allocation5], 1
    %14 = vsyncpa %s13, 0
    loop: start=0, step=1, limit=4
    $region2: #{tpu_custom_call.1} parent=1 // loop_pre_header
      _
    $region3: #{tpu_custom_call.1} parent=1 // loop_header
      %s16 = sphi 0, %s20
      %p17 = scmp.ge.s32.totalorder %s16, 4
      %s23 = sphi 0, %s35
      %s24 = sphi 0, %s31
      %s25 = sphi 0, %s23
      %s26 = sphi 0, %s24
      %s27 = sphi 0, %s25
      %s28 = sphi 0, %s26
      %s40 = sphi 0, %s42
      %s43 = sphi 0, %s40
      %s44 = sphi 0, %s43
      %s60 = sphi 0, %s44
      %s66 = sphi 0, %s68
      %s69 = sphi 0, %s66
      %s70 = sphi 0, %s69
      %s86 = sphi 0, %s70
      %s90 = sphi 0, %s90
      %s92 = sphi 0, %s90
      %s93 = sphi 0, %s92
      %s107 = sphi 0, %s93
      %s111 = sphi 0, %s111
      %s113 = sphi 0, %s111
      %s114 = sphi 0, %s113
      %s128 = sphi 0, %s114
      %s132 = sphi 0, %s132
      %s134 = sphi 0, %s132
      %s135 = sphi 0, %s134
      %s149 = sphi 0, %s135
      %s155 = sphi 0, %s157
      %s158 = sphi 0, %s155
      %s159 = sphi 0, %s158
      %s175 = sphi 0, %s159
    $region4: #{tpu_custom_call.1} parent=1 // loop_header_branch
      %19 = sbr.rel (%p17) target = $region8
    $region5: #{tpu_custom_call.1} parent=1 // loop_body
      %s21 = ssub.s32 %s16, 1
      %s22 = ssub.s32 %s16, 2
      %s29 = sadd.s32 1, %s24
      %p30 = scmp.ge.s32.totalorder %s29, 1
      %s31 = scalar_select %p30, 0, %s29
      %s32 = sadd.s32 1, %s23
      %s33 = scalar_select %p30, %s32, %s23
      %p34 = scmp.ge.s32.totalorder %s33, 2
      %s35 = scalar_select %p34, 0, %s33
      %s36 = ssub.s32 %s23, %s35
      %s37 = ssub.s32 %s24, %s31
      %s38 = sor.u32 %s36, %s37
      %p39 = scmp.eq.s32.totalorder %s38, 0
      %s41 = sadd.s32 %s40, 1
      %s42 = scalar_select %p39, %s40, %s41
      %p45 = pneg %p39
      %p46 = scmp.eq.s32.totalorder %s16, 1
      %p47 = por %p45, %p46
      %p48 = scmp.ne.s32.totalorder %s40, %s43
      %p49 = scmp.eq.s32.totalorder %s16, 0
      %p50 = por %p48, %p49
      %p51 = scmp.ne.s32.totalorder %s40, %s43
      %p52 = scmp.eq.s32.totalorder %s21, 1
      %p53 = por %p51, %p52
      %p54 = scmp.ne.s32.totalorder %s43, %s44
      %p55 = scmp.eq.s32.totalorder %s21, 0
      %p56 = por %p54, %p55
      %p57 = scmp.ne.s32.totalorder %s43, %s44
      %p58 = scmp.eq.s32.totalorder %s22, 1
      %p59 = por %p57, %p58
      %p61 = scmp.ne.s32.totalorder %s44, %s60
      %p62 = scmp.eq.s32.totalorder %s22, 0
      %p63 = por %p61, %p62
      %s64 = ssub.s32 %s24, %s31
      %p65 = scmp.eq.s32.totalorder %s64, 0
      %s67 = sadd.s32 %s66, 1
      %s68 = scalar_select %p65, %s66, %s67
      %p71 = pneg %p65
      %p72 = scmp.eq.s32.totalorder %s16, 1
      %p73 = por %p71, %p72
      %p74 = scmp.ne.s32.totalorder %s66, %s69
      %p75 = scmp.eq.s32.totalorder %s16, 0
      %p76 = por %p74, %p75
      %p77 = scmp.ne.s32.totalorder %s66, %s69
      %p78 = scmp.eq.s32.totalorder %s21, 1
      %p79 = por %p77, %p78
      %p80 = scmp.ne.s32.totalorder %s69, %s70
      %p81 = scmp.eq.s32.totalorder %s21, 0
      %p82 = por %p80, %p81
      %p83 = scmp.ne.s32.totalorder %s69, %s70
      %p84 = scmp.eq.s32.totalorder %s22, 1
      %p85 = por %p83, %p84
      %p87 = scmp.ne.s32.totalorder %s70, %s86
      %p88 = scmp.eq.s32.totalorder %s22, 0
      %p89 = por %p87, %p88
      %s91 = sadd.s32 %s90, 1
      %p94 = scmp.eq.s32.totalorder %s16, 1
      %p95 = scmp.ne.s32.totalorder %s90, %s92
      %p96 = scmp.eq.s32.totalorder %s16, 0
      %p97 = por %p95, %p96
      %p98 = scmp.ne.s32.totalorder %s90, %s92
      %p99 = scmp.eq.s32.totalorder %s21, 1
      %p100 = por %p98, %p99
      %p101 = scmp.ne.s32.totalorder %s92, %s93
      %p102 = scmp.eq.s32.totalorder %s21, 0
      %p103 = por %p101, %p102
      %p104 = scmp.ne.s32.totalorder %s92, %s93
      %p105 = scmp.eq.s32.totalorder %s22, 1
      %p106 = por %p104, %p105
      %p108 = scmp.ne.s32.totalorder %s93, %s107
      %p109 = scmp.eq.s32.totalorder %s22, 0
      %p110 = por %p108, %p109
      %s112 = sadd.s32 %s111, 1
      %p115 = scmp.eq.s32.totalorder %s16, 1
      %p116 = scmp.ne.s32.totalorder %s111, %s113
      %p117 = scmp.eq.s32.totalorder %s16, 0
      %p118 = por %p116, %p117
      %p119 = scmp.ne.s32.totalorder %s111, %s113
      %p120 = scmp.eq.s32.totalorder %s21, 1
      %p121 = por %p119, %p120
      %p122 = scmp.ne.s32.totalorder %s113, %s114
      %p123 = scmp.eq.s32.totalorder %s21, 0
      %p124 = por %p122, %p123
      %p125 = scmp.ne.s32.totalorder %s113, %s114
      %p126 = scmp.eq.s32.totalorder %s22, 1
      %p127 = por %p125, %p126
      %p129 = scmp.ne.s32.totalorder %s114, %s128
      %p130 = scmp.eq.s32.totalorder %s22, 0
      %p131 = por %p129, %p130
      %s133 = sadd.s32 %s132, 1
      %p136 = scmp.eq.s32.totalorder %s16, 1
      %p137 = scmp.ne.s32.totalorder %s132, %s134
      %p138 = scmp.eq.s32.totalorder %s16, 0
      %p139 = por %p137, %p138
      %p140 = scmp.ne.s32.totalorder %s132, %s134
      %p141 = scmp.eq.s32.totalorder %s21, 1
      %p142 = por %p140, %p141
      %p143 = scmp.ne.s32.totalorder %s134, %s135
      %p144 = scmp.eq.s32.totalorder %s21, 0
      %p145 = por %p143, %p144
      %p146 = scmp.ne.s32.totalorder %s134, %s135
      %p147 = scmp.eq.s32.totalorder %s22, 1
      %p148 = por %p146, %p147
      %p150 = scmp.ne.s32.totalorder %s135, %s149
      %p151 = scmp.eq.s32.totalorder %s22, 0
      %p152 = por %p150, %p151
      %s153 = ssub.s32 %s23, %s35
      %p154 = scmp.eq.s32.totalorder %s153, 0
      %s156 = sadd.s32 %s155, 1
      %s157 = scalar_select %p154, %s155, %s156
      %p160 = pneg %p154
      %p161 = scmp.eq.s32.totalorder %s16, 1
      %p162 = por %p160, %p161
      %p163 = scmp.ne.s32.totalorder %s155, %s158
      %p164 = scmp.eq.s32.totalorder %s16, 0
      %p165 = por %p163, %p164
      %p166 = scmp.ne.s32.totalorder %s155, %s158
      %p167 = scmp.eq.s32.totalorder %s21, 1
      %p168 = por %p166, %p167
      %p169 = scmp.ne.s32.totalorder %s158, %s159
      %p170 = scmp.eq.s32.totalorder %s21, 0
      %p171 = por %p169, %p170
      %p172 = scmp.ne.s32.totalorder %s158, %s159
      %p173 = scmp.eq.s32.totalorder %s22, 1
      %p174 = por %p172, %p173
      %p176 = scmp.ne.s32.totalorder %s159, %s175
      %p177 = scmp.eq.s32.totalorder %s22, 0
      %p178 = por %p176, %p177
      %p179 = scmp.le.s32.totalorder 1, %s16
      %p180 = scmp.lt.s32.totalorder %s16, 3
      %p181 = pnand %p179, %p180
      %p182 = pneg %p181
      // Predicated region
      $region9: #{tpu_custom_call.1} parent=5 // pred_check
        _
      $region10: #{tpu_custom_call.1} parent=5 // pred_check_branch
        %184 = sbr.rel (%p181) target = $region12
      $region11: #{tpu_custom_call.1} parent=5 // pred_region
        %s185 = ssub.s32 %s16, 1
        // Predicated region
        $region13: #{tpu_custom_call.1} parent=11 // pred_check
          %p186 = pneg %p82
        $region14: #{tpu_custom_call.1} parent=11 // pred_check_branch
          %188 = sbr.rel (%p186) target = $region16
        $region15: #{tpu_custom_call.1} parent=11 // pred_region
          %p189 = scmp.lt.s32.totalorder %s26, 0
          %s190 = scalar_select %p189, %s26, 0
          %s191 = smul.addr %s190, 4
          %s192 = scalar_lea.vmem %s1, %s191
        $region16: #{tpu_custom_call.1} parent=11 // pred_fallthru
          _
        // Predicated region
        $region17: #{tpu_custom_call.1} parent=11 // pred_check
          %p193 = pneg %p103
        $region18: #{tpu_custom_call.1} parent=11 // pred_check_branch
          %195 = sbr.rel (%p193) target = $region20
        $region19: #{tpu_custom_call.1} parent=11 // pred_region
          _
        $region20: #{tpu_custom_call.1} parent=11 // pred_fallthru
          _
        // Predicated region
        $region21: #{tpu_custom_call.1} parent=11 // pred_check
          %p196 = pneg %p124
        $region22: #{tpu_custom_call.1} parent=11 // pred_check_branch
          %198 = sbr.rel (%p196) target = $region24
        $region23: #{tpu_custom_call.1} parent=11 // pred_region
          _
        $region24: #{tpu_custom_call.1} parent=11 // pred_fallthru
          _
        // Predicated region
        $region25: #{tpu_custom_call.1} parent=11 // pred_check
          %p199 = pneg %p145
        $region26: #{tpu_custom_call.1} parent=11 // pred_check_branch
          %201 = sbr.rel (%p199) target = $region28
        $region27: #{tpu_custom_call.1} parent=11 // pred_region
          _
        $region28: #{tpu_custom_call.1} parent=11 // pred_fallthru
          _
      $region12: #{tpu_custom_call.1} parent=5 // pred_fallthru
        _
      %p202 = scmp.lt.s32.totalorder %s16, 2
      // Predicated region
      $region29: #{tpu_custom_call.1} parent=5 // pred_check
        %p203 = pneg %p202
      $region30: #{tpu_custom_call.1} parent=5 // pred_check_branch
        %205 = sbr.rel (%p203) target = $region32
      $region31: #{tpu_custom_call.1} parent=5 // pred_region
        // Predicated region
        $region33: #{tpu_custom_call.1} parent=31 // pred_check
          %p206 = pneg %p50
        $region34: #{tpu_custom_call.1} parent=31 // pred_check_branch
          %208 = sbr.rel (%p206) target = $region36
        $region35: #{tpu_custom_call.1} parent=31 // pred_region
          %s209 = smul.u32 16, %s23
          %s210 = ssub.s32 25, %s209
          %p211 = scmp.lt.s32.totalorder %s210, 16
          %s212 = scalar_select %p211, %s210, 16
          %s213 = smul.u32 8, %s212
          %p214 = scmp.lt.s32.totalorder %s209, 24
          %s215 = scalar_select %p214, %s209, 24
          %p216 = scmp.lt.s32.totalorder %s24, 0
          %s217 = scalar_select %p216, %s24, 0
          %s218 = sadd.s32 %s217, %s215
          %s219 = smul.addr %s218, 8
          %s220 = scalar_lea.vmem %s0, %s219
          %s221 = smul.u32 16, %s23
          %s222 = ssub.s32 25, %s221
          %p223 = scmp.lt.s32.totalorder %s222, 16
          %s224 = scalar_select %p223, %s222, 16
          %s225 = smul.u32 8, %s224
        $region36: #{tpu_custom_call.1} parent=31 // pred_fallthru
          _
      $region32: #{tpu_custom_call.1} parent=5 // pred_fallthru
        _
      %p226 = scmp.le.s32.totalorder 1, %s16
      %p227 = scmp.lt.s32.totalorder %s16, 3
      %p228 = pnand %p226, %p227
      %p229 = pneg %p228
      // Predicated region
      $region37: #{tpu_custom_call.1} parent=5 // pred_check
        _
      $region38: #{tpu_custom_call.1} parent=5 // pred_check_branch
        %231 = sbr.rel (%p228) target = $region40
      $region39: #{tpu_custom_call.1} parent=5 // pred_region
        %s232 = ssub.s32 %s16, 1
        %s233 = smul.u32 16, %s25
        %s234 = ssub.s32 25, %s233
        %p235 = scmp.lt.s32.totalorder %s234, 16
        %s236 = scalar_select %p235, %s234, 16
        %s237 = smul.u32 8, %s236
        %p238 = scmp.lt.s32.totalorder %s233, 24
        %s239 = scalar_select %p238, %s233, 24
        %p240 = scmp.lt.s32.totalorder %s26, 0
        %s241 = scalar_select %p240, %s26, 0
        %s242 = sadd.s32 %s241, %s239
        %s243 = smul.addr %s242, 8
        %s244 = scalar_lea.vmem %s0, %s243
        %p245 = pneg %p56
        %p246 = pneg %p53
        %p247 = scmp.lt.s32.totalorder %s26, 0
        %s248 = scalar_select %p247, %s26, 0
        %s249 = smul.addr %s248, 4
        %s250 = scalar_lea.vmem %s1, %s249
        %p251 = pneg %p82
        %p252 = pneg %p79
        %p253 = pneg %p103
        %p254 = pneg %p100
        %p255 = pneg %p124
        %p256 = pneg %p121
        %p257 = pneg %p145
        %p258 = pneg %p142
        %p259 = pneg %p171
        %p260 = pneg %p168
        %s261 = sand.u32 %s158, 1
        %s262 = scalar_lea.sflag [#allocation5], %s261
        %s263 = sand.u32 %s158, 1
        %s264 = scalar_lea.vmem [#allocation4], %s263
        %s265 = smul.u32 16, %s25
        %s266 = ssub.s32 25, %s265
        %p267 = scmp.lt.s32.totalorder %s266, 16
        %s268 = scalar_select %p267, %s266, 16
        %s269 = smul.u32 8, %s268
        %p270 = scmp.lt.s32.totalorder %s265, 24
        %s271 = scalar_select %p270, %s265, 24
        %p272 = scmp.lt.s32.totalorder %s26, 0
        %s273 = scalar_select %p272, %s26, 0
        %s274 = sadd.s32 %s273, %s271
        %s275 = smul.addr %s274, 8
        %s276 = scalar_lea.vmem %s0, %s275
        %s277 = smul.u32 16, %s25
        %s278 = ssub.s32 25, %s277
        %p279 = scmp.lt.s32.totalorder %s278, 16
        %s280 = scalar_select %p279, %s278, 16
        %s281 = smul.u32 8, %s280
        %p282 = scmp.lt.s32.totalorder %s26, 0
        %s283 = scalar_select %p282, %s26, 0
        %s284 = smul.addr %s283, 4
        %s285 = scalar_lea.vmem %s1, %s284
        %p286 = scmp.eq.s32.totalorder %s26, 0
        // Predicated region
        $region41: #{tpu_custom_call.1} parent=39 // pred_check
          %p287 = pneg %p286
        $region42: #{tpu_custom_call.1} parent=39 // pred_check_branch
          %289 = sbr.rel (%p287) target = $region44
        $region43: #{tpu_custom_call.1} parent=39 // pred_region
          %290 = vst [vmem:[#allocation2] sm:$0xf] 0.0
        $region44: #{tpu_custom_call.1} parent=39 // pred_fallthru
          _
        %v291 = vld [vmem:[%s276] sm:$0xff]
        %v292 = vld [vmem:[%s276 + $0x8] sm:$0xff]
        %v293 = vld [vmem:[%s276 + $0x10] sm:$0xff]
        %v294 = vld [vmem:[%s276 + $0x18] sm:$0xff]
        %v295 = vld [vmem:[%s276 + $0x20] sm:$0xff]
        %v296 = vld [vmem:[%s276 + $0x28] sm:$0xff]
        %v297 = vld [vmem:[%s276 + $0x30] sm:$0xff]
        %v298 = vld [vmem:[%s276 + $0x38] sm:$0xff]
        %v299 = vld [vmem:[%s276 + $0x40] sm:$0xff]
        %v300 = vld [vmem:[%s276 + $0x48] sm:$0xff]
        %v301 = vld [vmem:[%s276 + $0x50] sm:$0xff]
        %v302 = vld [vmem:[%s276 + $0x58] sm:$0xff]
        %v303 = vld [vmem:[%s276 + $0x60] sm:$0xff]
        %v304 = vld [vmem:[%s276 + $0x68] sm:$0xff]
        %v305 = vld [vmem:[%s276 + $0x70] sm:$0xff]
        %v306 = vld [vmem:[%s276 + $0x78] sm:$0xff]
        %v307 = vld [vmem:[%s285] sm:$0xf]
        %v308 = vld [vmem:[#allocation2] sm:$0xf]
        %v309 = vpack.c.bf16 %v307, %v307
        %v310 = vpack.c.bf16 %v292, %v291
        %v311 = vpack.c.bf16 %v294, %v293
        %v312 = vpack.c.bf16 %v296, %v295
        %v313 = vpack.c.bf16 %v298, %v297
        %v314 = vpack.c.bf16 %v300, %v299
        %v315 = vpack.c.bf16 %v302, %v301
        %v316 = vpack.c.bf16 %v304, %v303
        %v317 = vpack.c.bf16 %v306, %v305
        %vm318 = vcmask 130048
        %v320 = vsel %vm318, %v309, 0
        %v323 = vsel %vm318, %v310, 0
        %v326 = vsel %vm318, %v311, 0
        %v329 = vsel %vm318, %v312, 0
        %v332 = vsel %vm318, %v313, 0
        %v335 = vsel %vm318, %v314, 0
        %v338 = vsel %vm318, %v315, 0
        %v341 = vsel %vm318, %v316, 0
        %v344 = vsel %vm318, %v317, 0
        %346 = vmatpush.bf16.xpose.msra.mxu0 %v344
        %347 = vmatpush.bf16.xpose.msra.mxu0 %v341
        %348 = vmatpush.bf16.xpose.msra.mxu0 %v338
        %349 = vmatpush.bf16.xpose.msra.mxu0 %v335
        %350 = vmatpush.bf16.xpose.msra.mxu0 %v332
        %351 = vmatpush.bf16.xpose.msra.mxu0 %v329
        %352 = vmatpush.bf16.xpose.msra.mxu0 %v326
        %353 = vmatpush.bf16.xpose.msra.mxu0 %v323
        %354 = vmatmul.bf16.gmra.mxu0 %v320
        %v355 = vpop.f32.mrf.mxu0
        %v356 = vadd.f32 0.0, %v355
        %v357 = vpop.f32.mrf.mxu0
        %358 = vdwg.mxu0
        %v359 = vadd.f32 %v308, %v356
        %360 = vst [vmem:[#allocation2] sm:$0xf] %v359
        // Predicated region
        $region45: #{tpu_custom_call.1} parent=39 // pred_check
          %p361 = pneg %p286
        $region46: #{tpu_custom_call.1} parent=39 // pred_check_branch
          %363 = sbr.rel (%p361) target = $region48
        $region47: #{tpu_custom_call.1} parent=39 // pred_region
          %v364 = vld [vmem:[#allocation2] sm:$0xf]
          %v365 = vld [vmem:[%s2] sm:$0xf]
          %367 = vset.pattern.permute.xlu0 0
          %368 = vperm.xlu0 %367, %v365
          %v369 = vpop.permute.xlu0 %368
          %v371 = vadd.f32 %v364, %v369
          %v372 = vmax.f32 %v371, 0.0
          %v373 = vld [vmem:[%s3] sm:$0xf]
          %375 = vset.pattern.permute.xlu0 0
          %376 = vperm.xlu0 %375, %v373
          %v377 = vpop.permute.xlu0 %376
          %v379 = vmul.f32 %v372, %v377
          %vm380 = vcmask 1043456
          %v381 = vsel %vm380, %v379, 0.0
          %v382 = vrot.slane %v381, 4
          %v383 = vadd.f32 %v381, %v382
          %v384 = vrot.slane %v383, 2
          %v385 = vadd.f32 %v383, %v384
          %v386 = vrot.slane %v385, 1
          %v387 = vadd.f32 %v385, %v386
          %v388 = vld [vmem:[#allocation3] sm:$0x1]
          %390 = vset.pattern.permute.xlu0 0
          %391 = vperm.xlu0 %390, %v388
          %v392 = vpop.permute.xlu0 %391
          %v394 = vperm.slane %v392, 0
          %v395 = vadd.f32 %v387, %v394
          %v396 = vxor.u32 %v395, 2147483648
          %v397 = vmul.f32 %v396, 1.442695
          %v398 = vpow.pop %v397
          %v399 = vadd.f32 %v398, 1.0
          %v400 = vrcp.pop %v399
          %v401 = vmul.f32 %v399, %v400
          %v402 = vsub.f32 1.0, %v401
          %v403 = vmul.f32 %v400, %v402
          %v404 = vadd.f32 %v400, %v403
          %vm405 = vweird.f32 %v399
          %vm406 = vweird.f32 %v400
          %vm407 = vmor %vm405, %vm406
          %v408 = vsel %vm407, %v400, %v404
          %v409 = vand.u32 2147483647, %v399
          %vm410 = vcmp.eq.f32.partialorder %v409, 8.507059e+37
          %v411 = vand.u32 %v399, 2147483648
          %v412 = vor.u32 1.1754944e-38, %v411
          %v413 = vsel %vm410, %v412, %v408
          %v414 = vmul.f32 1.0, %v413
          %415 = vst [vmem:[%s264] sm:$0x1] %v414
        $region48: #{tpu_custom_call.1} parent=39 // pred_fallthru
          _
        %s416 = sand.u32 %s158, 1
        %s417 = scalar_lea.sflag [#allocation5], %s416
        %s418 = sand.u32 %s158, 1
        %s419 = scalar_lea.vmem [#allocation4], %s418
        // Predicated region
        $region49: #{tpu_custom_call.1} parent=39 // pred_check
          %p420 = pneg %p168
        $region50: #{tpu_custom_call.1} parent=39 // pred_check_branch
          %422 = sbr.rel (%p420) target = $region52
        $region51: #{tpu_custom_call.1} parent=39 // pred_region
          %424 = vsyncadd %s417, 0
          %s425 = scalar_lea.hbm %s5, %s25
          %s427 = sshll.u32 %s419, 4
          %s428 = int_to_ptr.vmem [resolvable:$true] %s427
          %s429 = sshll.u32 %s425, 4
          %s430 = int_to_ptr.hbm [resolvable:$true] %s429
          %432 = dma.vmem_to_hbm [thread:$0]  %s428, 16, %s430, %s417
        $region52: #{tpu_custom_call.1} parent=39 // pred_fallthru
          _
      $region40: #{tpu_custom_call.1} parent=5 // pred_fallthru
        _
      %p433 = scmp.le.s32.totalorder 2, %s16
      // Predicated region
      $region53: #{tpu_custom_call.1} parent=5 // pred_check
        %p434 = pneg %p433
      $region54: #{tpu_custom_call.1} parent=5 // pred_check_branch
        %436 = sbr.rel (%p434) target = $region56
      $region55: #{tpu_custom_call.1} parent=5 // pred_region
        %s437 = ssub.s32 %s16, 2
        // Predicated region
        $region57: #{tpu_custom_call.1} parent=55 // pred_check
          %p438 = pneg %p174
        $region58: #{tpu_custom_call.1} parent=55 // pred_check_branch
          %440 = sbr.rel (%p438) target = $region60
        $region59: #{tpu_custom_call.1} parent=55 // pred_region
          %s441 = sand.u32 %s159, 1
          %s442 = scalar_lea.sflag [#allocation5], %s441
          %s443 = sand.u32 %s159, 1
          %s444 = scalar_lea.vmem [#allocation4], %s443
          %446 = dma.done %s442, 16
        $region60: #{tpu_custom_call.1} parent=55 // pred_fallthru
          _
      $region56: #{tpu_custom_call.1} parent=5 // pred_fallthru
        _
    $region6: #{tpu_custom_call.1} parent=1 // loop_footer
      %s20 = sadd.s32 1, %s16
    $region7: #{tpu_custom_call.1} parent=1 // loop_footer_branch
      %15 = sbr.rel target = $region3
    $region8: #{tpu_custom_call.1} parent=1 // loop_exit
      _
    %447 = vsyncpa [#allocation5], 1
    %s448 = scalar_lea.sflag [#allocation5], 1
    %449 = vsyncpa %s448, 1

</llo_original>
